<compile_context>
chip_gen: v7x
topology: tpu7x:2x2x1
jax: 0.10.0
libtpu: 0.0.40
codegen_flags: <defaults>
</compile_context>

<pallas_src>
import jax
import jax.numpy as jnp
from jax.experimental import pallas as pl
from jax.experimental.pallas import tpu as pltpu


def normalize_kernel(x_ref, sd_ref, o_ref):
    # x_ref, o_ref: (tile_rows, inner) tile in VMEM
    # sd_ref:       (tile_rows, 2) packed [scale | dist] (lane-broadcast per row)
    sd = sd_ref[...]
    scale = sd[:, 0:1]
    dist = sd[:, 1:2]
    o_ref[...] = (x_ref[...] * scale - dist).astype(o_ref.dtype)


def _round_down(v, m):
    return (v // m) * m


def _round_up(v, m):
    return -(-v // m) * m


def _pick_row_tile(num_rows, row_bytes_eff, itemsize, target_bytes=2 << 20):
    """Row tile for a (rows, inner) elementwise kernel.

    * multiple of the dtype sublane granule (8 f32 / 16 bf16 / 32 int8), or
      equal to the full row count (the (8,128) BlockSpec rule),
    * per-block bytes (x tile + lane-padded params) <= ~2 MiB so full double
      buffering fits the default scoped VMEM on v5e/v6e/v7x,
    * >= 2 grid steps whenever possible so v7x's second TensorCore has work.
    """
    sub = {4: 8, 2: 16, 1: 32}.get(itemsize, 8)
    t = _round_down(max(target_bytes // max(row_bytes_eff, 1), sub), sub)
    t = max(sub, t)
    t = min(t, num_rows)
    if t >= num_rows and num_rows > sub:
        # Whole tensor fits one tile: split into ~2 tiles for megacore.
        t = min(num_rows, max(sub, _round_up(-(-num_rows // 2), sub)))
        if t >= num_rows:  # can't split below sublane granularity
            t = num_rows
    return t


def normalize(x, scale, dist, repeat=6):
    """Pallas equivalent of Normalize.forward (x * scale_rep - dist_rep)."""
    N, C, H, W = x.shape
    base = scale.shape[1]
    assert C == repeat * base, "channel count must equal repeat * base channels"
    HW = H * W

    # bf16 inputs: compute natively in bf16 (free win on v6e/v7x, tiny rounding
    # delta vs PyTorch f32 math); everything else computes in f32.
    comp_dtype = jnp.bfloat16 if x.dtype == jnp.dtype(jnp.bfloat16) else jnp.float32

    # --- lane-dense flattening -------------------------------------------
    # Prefer a last dim that is a multiple of 128 (unmasked full-lane stores).
    if HW % 128 == 0 or W % 128 != 0:
        rows, inner, per_row_reps = N * C, HW, 1
        # (If HW % 128 != 0 here we fall back to masked stores; still correct.)
    else:
        rows, inner, per_row_reps = N * C * H, W, H
    x_flat = x.reshape(rows, inner)

    # --- per-row params, packed [scale | dist] ----------------------------
    # torch .repeat(1, repeat, 1, 1) tiles the base channels -> jnp.tile order.
    scale_c = jnp.tile(scale.reshape(base).astype(comp_dtype), (repeat,))  # (C,)
    dist_c = jnp.tile(dist.reshape(base).astype(comp_dtype), (repeat,))    # (C,)
    scale_rows = jnp.repeat(jnp.tile(scale_c, (N,)), per_row_reps)         # (rows,)
    dist_rows = jnp.repeat(jnp.tile(dist_c, (N,)), per_row_reps)           # (rows,)
    sd = jnp.stack([scale_rows, dist_rows], axis=1)                        # (rows, 2)

    # --- tiling ------------------------------------------------------------
    # Budget per row: x row + the lane-padded (row, 2)->(row, 128) params row.
    row_bytes_eff = inner * x.dtype.itemsize + 128 * jnp.dtype(comp_dtype).itemsize
    tile_rows = _pick_row_tile(rows, row_bytes_eff, x.dtype.itemsize)
    grid = (-(-rows // tile_rows),)  # cdiv; partial last tile handled by Pallas

    out_flat = pl.pallas_call(
        normalize_kernel,
        out_shape=jax.ShapeDtypeStruct((rows, inner), x.dtype),
        grid=grid,
        in_specs=[
            pl.BlockSpec((tile_rows, inner), lambda i: (i, 0)),
            pl.BlockSpec((tile_rows, 2), lambda i: (i, 0)),
        ],
        out_specs=pl.BlockSpec((tile_rows, inner), lambda i: (i, 0)),
        compiler_params=pltpu.CompilerParams(
            dimension_semantics=("parallel",)),
        cost_estimate=pl.CostEstimate(
            flops=2 * rows * inner,
            transcendentals=0,
            bytes_accessed=2 * rows * inner * x.dtype.itemsize
            + rows * 2 * jnp.dtype(comp_dtype).itemsize),
    )(x_flat, sd)

    return out_flat.reshape(N, C, H, W)


if __name__ == "__main__":
    key = jax.random.PRNGKey(0)

    # Deterministic "buffers": per-RGB-channel mean / scale, shape (1, 3, 1, 1).
    dist = jnp.array([0.485, 0.456, 0.406], dtype=jnp.float32).reshape(1, 3, 1, 1)
    scale = jnp.array([1.0 / 0.229, 1.0 / 0.224, 1.0 / 0.225],
                      dtype=jnp.float32).reshape(1, 3, 1, 1)

    # Input: N=2, C = 6 * 3 = 18 channels, 16x16 spatial (NCHW).
    x = jax.random.uniform(key, (2, 18, 16, 16), dtype=jnp.float32)

    out = normalize(x, scale, dist, repeat=6)
    out = jax.block_until_ready(out)

    # Pure-JAX reference check.
    scale_full = jnp.tile(scale, (1, 6, 1, 1))
    dist_full = jnp.tile(dist, (1, 6, 1, 1))
    ref = x * scale_full - dist_full
    assert out.shape == x.shape and out.dtype == x.dtype
    assert jnp.allclose(out, ref, atol=1e-6, rtol=1e-6)

    print("KERNEL_OK")
</pallas_src>

<mosaic_0001>
module attributes {stable_mosaic.version = 11 : i64} {
  func.func @normalize_kernel(%arg0: i32, %arg1: memref<24x256xf32, #tpu.memory_space<vmem>>, %arg2: memref<24x2xf32, #tpu.memory_space<vmem>>, %arg3: memref<24x256xf32, #tpu.memory_space<vmem>>) attributes {dimension_semantics = [#tpu.dimension_semantics<parallel>], iteration_bounds = array<i64: 2>, scalar_prefetch = 0 : i64, scratch_operands = 0 : i64, tpu.core_type = #tpu.core_type<tc>, window_params = [{transform_indices = @transform_0, window_bounds = array<i64: 24, 256>}, {transform_indices = @transform_1, window_bounds = array<i64: 24, 2>}, {transform_indices = @transform_2, window_bounds = array<i64: 24, 256>}]} {
    %c0 = arith.constant 0 : index
    %c0_0 = arith.constant 0 : index
    %0 = vector.load %arg2[%c0, %c0_0] : memref<24x2xf32, #tpu.memory_space<vmem>>, vector<24x2xf32>
    %1 = vector.extract_strided_slice %0 {offsets = [0, 0], sizes = [24, 1], strides = [1, 1]} : vector<24x2xf32> to vector<24x1xf32>
    %2 = vector.extract_strided_slice %0 {offsets = [0, 1], sizes = [24, 1], strides = [1, 1]} : vector<24x2xf32> to vector<24x1xf32>
    %c0_1 = arith.constant 0 : index
    %c0_2 = arith.constant 0 : index
    %3 = vector.load %arg1[%c0_1, %c0_2] : memref<24x256xf32, #tpu.memory_space<vmem>>, vector<24x256xf32>
    %4 = vector.broadcast %1 : vector<24x1xf32> to vector<24x256xf32>
    %5 = arith.mulf %3, %4 : vector<24x256xf32>
    %6 = vector.broadcast %2 : vector<24x1xf32> to vector<24x256xf32>
    %7 = arith.subf %5, %6 : vector<24x256xf32>
    %c0_3 = arith.constant 0 : index
    %c0_4 = arith.constant 0 : index
    %8 = vector.load %arg3[%c0_3, %c0_4] : memref<24x256xf32, #tpu.memory_space<vmem>>, vector<24x256xf32>
    tpu.vector_store %arg3[%c0_3, %c0_4], %7 {strides = array<i32>} : memref<24x256xf32, #tpu.memory_space<vmem>>, vector<24x256xf32>,
    return
  }
  func.func @transform_0(%arg0: i32) -> (i32, i32) {
    %c0_i32 = arith.constant 0 : i32
    %c0_i32_0 = arith.constant 0 : i32
    return %arg0, %c0_i32 : i32, i32
  }
  func.func @transform_1(%arg0: i32) -> (i32, i32) {
    %c0_i32 = arith.constant 0 : i32
    %c0_i32_0 = arith.constant 0 : i32
    return %arg0, %c0_i32 : i32, i32
  }
  func.func @transform_2(%arg0: i32) -> (i32, i32) {
    %c0_i32 = arith.constant 0 : i32
    %c0_i32_0 = arith.constant 0 : i32
    return %arg0, %c0_i32 : i32, i32
  }
}

</mosaic_0001>

<llo_original>
// kernel: tpu_custom_call.1
$region0: #{tpu_custom_call.1}
  #allocation0 [shape = 'u32[]', space=smem, size = 0x4, offset = 0x4, fixed_abs, tag = 'smem constant byte address 0x4 - core index']
  #allocation1 [shape = 'u32[144,128]{1,0:T(1,128)}', space=vmem, size = 0x12000, scoped, tag = 'internal scratch']
  %s0 = inlined_call_operand.hbm [shape: f32[36,256], index: 0, kind: input, shape index: {}]
  %s1 = inlined_call_operand.vmem [shape: f32[36,2], index: 1, kind: input, shape index: {}]
  %s2 = inlined_call_operand.hbm [shape: f32[36,256], index: 2, kind: output, shape index: {}]
  %s3 = sld [smem:[#allocation0]]
  $region45: #{tpu_custom_call.1} parent=0
    _
  %s5 = ssub.s32 1, %s3
  %s6 = scalar_select 0, %s5, %s3
  $region1: #{tpu_custom_call.1} parent=0
    #allocation2 [shape = 'u8[49152]{0}', space=vmem, size = 0xc000, scoped, tag = 'input window, operand 0']
    #allocation3 [shape = 's32[2]{0}', space=sflag, size = 0x8, scoped, tag = 'scoped memory for tpu_custom_call.1']
    #allocation4 [shape = 's32[2]{0}', space=sflag, size = 0x8, scoped, tag = 'scoped memory for tpu_custom_call.1']
    #allocation5 [shape = 'u8[49152]{0}', space=vmem, size = 0xc000, scoped, tag = 'output window, operand 0']
    %7 = vsyncpa [#allocation3], 0
    %s8 = scalar_lea.sflag [#allocation3], 1
    %9 = vsyncpa %s8, 0
    %10 = vsyncpa [#allocation4], 0
    %s11 = scalar_lea.sflag [#allocation4], 1
    %12 = vsyncpa %s11, 0
    loop: start=0, step=1, limit=4
    $region2: #{tpu_custom_call.1} parent=1 // loop_pre_header
      _
    $region3: #{tpu_custom_call.1} parent=1 // loop_header
      %s14 = sphi 0, %s18
      %p15 = scmp.ge.s32.totalorder %s14, 4
      %s24 = sphi 0, %s26
      %s27 = sphi 0, %s24
      %s28 = sphi 0, %s27
      %s44 = sphi 0, %s28
      %s50 = sphi 0, %s52
      %s53 = sphi 0, %s50
      %s54 = sphi 0, %s53
      %s70 = sphi 0, %s54
      %s76 = sphi 0, %s78
      %s79 = sphi 0, %s76
      %s80 = sphi 0, %s79
      %s96 = sphi 0, %s80
    $region4: #{tpu_custom_call.1} parent=1 // loop_header_branch
      %17 = sbr.rel (%p15) target = $region8
    $region5: #{tpu_custom_call.1} parent=1 // loop_body
      %s19 = ssub.s32 %s14, 1
      %s20 = ssub.s32 %s14, 2
      %s21 = sadd.s32 %s14, 1
      %s22 = ssub.s32 %s14, %s21
      %p23 = scmp.eq.s32.totalorder %s22, 0
      %s25 = sadd.s32 %s24, 1
      %s26 = scalar_select %p23, %s24, %s25
      %p29 = pneg %p23
      %p30 = scmp.eq.s32.totalorder %s14, 1
      %p31 = por %p29, %p30
      %p32 = scmp.ne.s32.totalorder %s24, %s27
      %p33 = scmp.eq.s32.totalorder %s14, 0
      %p34 = por %p32, %p33
      %p35 = scmp.ne.s32.totalorder %s24, %s27
      %p36 = scmp.eq.s32.totalorder %s19, 1
      %p37 = por %p35, %p36
      %p38 = scmp.ne.s32.totalorder %s27, %s28
      %p39 = scmp.eq.s32.totalorder %s19, 0
      %p40 = por %p38, %p39
      %p41 = scmp.ne.s32.totalorder %s27, %s28
      %p42 = scmp.eq.s32.totalorder %s20, 1
      %p43 = por %p41, %p42
      %p45 = scmp.ne.s32.totalorder %s28, %s44
      %p46 = scmp.eq.s32.totalorder %s20, 0
      %p47 = por %p45, %p46
      %s48 = ssub.s32 %s14, %s21
      %p49 = scmp.eq.s32.totalorder %s48, 0
      %s51 = sadd.s32 %s50, 1
      %s52 = scalar_select %p49, %s50, %s51
      %p55 = pneg %p49
      %p56 = scmp.eq.s32.totalorder %s14, 1
      %p57 = por %p55, %p56
      %p58 = scmp.ne.s32.totalorder %s50, %s53
      %p59 = scmp.eq.s32.totalorder %s14, 0
      %p60 = por %p58, %p59
      %p61 = scmp.ne.s32.totalorder %s50, %s53
      %p62 = scmp.eq.s32.totalorder %s19, 1
      %p63 = por %p61, %p62
      %p64 = scmp.ne.s32.totalorder %s53, %s54
      %p65 = scmp.eq.s32.totalorder %s19, 0
      %p66 = por %p64, %p65
      %p67 = scmp.ne.s32.totalorder %s53, %s54
      %p68 = scmp.eq.s32.totalorder %s20, 1
      %p69 = por %p67, %p68
      %p71 = scmp.ne.s32.totalorder %s54, %s70
      %p72 = scmp.eq.s32.totalorder %s20, 0
      %p73 = por %p71, %p72
      %s74 = ssub.s32 %s14, %s21
      %p75 = scmp.eq.s32.totalorder %s74, 0
      %s77 = sadd.s32 %s76, 1
      %s78 = scalar_select %p75, %s76, %s77
      %p81 = pneg %p75
      %p82 = scmp.eq.s32.totalorder %s14, 1
      %p83 = por %p81, %p82
      %p84 = scmp.ne.s32.totalorder %s76, %s79
      %p85 = scmp.eq.s32.totalorder %s14, 0
      %p86 = por %p84, %p85
      %p87 = scmp.ne.s32.totalorder %s76, %s79
      %p88 = scmp.eq.s32.totalorder %s19, 1
      %p89 = por %p87, %p88
      %p90 = scmp.ne.s32.totalorder %s79, %s80
      %p91 = scmp.eq.s32.totalorder %s19, 0
      %p92 = por %p90, %p91
      %p93 = scmp.ne.s32.totalorder %s79, %s80
      %p94 = scmp.eq.s32.totalorder %s20, 1
      %p95 = por %p93, %p94
      %p97 = scmp.ne.s32.totalorder %s80, %s96
      %p98 = scmp.eq.s32.totalorder %s20, 0
      %p99 = por %p97, %p98
      %p100 = scmp.le.s32.totalorder 1, %s14
      %p101 = scmp.lt.s32.totalorder %s14, 3
      %p102 = pnand %p100, %p101
      %p103 = pneg %p102
      // Predicated region
      $region9: #{tpu_custom_call.1} parent=5 // pred_check
        _
      $region10: #{tpu_custom_call.1} parent=5 // pred_check_branch
        %105 = sbr.rel (%p102) target = $region12
      $region11: #{tpu_custom_call.1} parent=5 // pred_region
        %s106 = ssub.s32 %s14, 1
      $region12: #{tpu_custom_call.1} parent=5 // pred_fallthru
        _
      %p107 = scmp.lt.s32.totalorder %s14, 2
      // Predicated region
      $region13: #{tpu_custom_call.1} parent=5 // pred_check
        %p108 = pneg %p107
      $region14: #{tpu_custom_call.1} parent=5 // pred_check_branch
        %110 = sbr.rel (%p108) target = $region16
      $region15: #{tpu_custom_call.1} parent=5 // pred_region
        // Predicated region
        $region17: #{tpu_custom_call.1} parent=15 // pred_check
          %p111 = pneg %p34
        $region18: #{tpu_custom_call.1} parent=15 // pred_check_branch
          %113 = sbr.rel (%p111) target = $region20
        $region19: #{tpu_custom_call.1} parent=15 // pred_region
          %s114 = sand.u32 %s24, 1
          %s115 = scalar_lea.sflag [#allocation3], %s114
          %s116 = sand.u32 %s24, 1
          %s117 = smul.addr %s116, 48
          %s118 = scalar_lea.vmem [#allocation2], %s117
          %s119 = smul.u32 3, %s14
          %s120 = ssub.s32 5, %s119
          %p121 = scmp.lt.s32.totalorder %s120, 3
          %s122 = scalar_select %p121, %s120, 3
          %s123 = smul.u32 128, %s122
          %s124 = smul.u32 %s123, 2
          %s126 = ssub.s32 768, %s124
          %127 = vsyncadd %s115, %s126
          %p128 = scmp.ne.s32.totalorder 0, %s124
          %s129 = smul.addr %s119, 2
          %s130 = smul.addr %s129, 128
          %s131 = scalar_lea.hbm %s0, %s130
          %s132 = smul.u32 16, %s122
          %s133 = sshll.u32 %s118, 4
          %s134 = int_to_ptr.vmem [resolvable:$true] %s133
          %s135 = sshll.u32 %s132, 4
          %139 = dma.hbm_to_vmem [thread:$0]  (%p128), %s131, %s135, %s134, %s115, 256, 256, 16
        $region20: #{tpu_custom_call.1} parent=15 // pred_fallthru
          _
        // Predicated region
        $region21: #{tpu_custom_call.1} parent=15 // pred_check
          %p140 = pneg %p60
        $region22: #{tpu_custom_call.1} parent=15 // pred_check_branch
          %142 = sbr.rel (%p140) target = $region24
        $region23: #{tpu_custom_call.1} parent=15 // pred_region
          %s143 = smul.u32 3, %s14
          %s144 = ssub.s32 5, %s143
          %p145 = scmp.lt.s32.totalorder %s144, 3
          %s146 = scalar_select %p145, %s144, 3
          %s147 = smul.u32 128, %s146
          %p148 = scmp.lt.s32.totalorder %s143, 4
          %s149 = scalar_select %p148, %s143, 4
          %s150 = smul.addr %s149, 8
          %s151 = scalar_lea.vmem %s1, %s150
          %s152 = smul.u32 3, %s14
          %s153 = ssub.s32 5, %s152
          %p154 = scmp.lt.s32.totalorder %s153, 3
          %s155 = scalar_select %p154, %s153, 3
          %s156 = smul.u32 128, %s155
        $region24: #{tpu_custom_call.1} parent=15 // pred_fallthru
          _
      $region16: #{tpu_custom_call.1} parent=5 // pred_fallthru
        _
      %p157 = scmp.le.s32.totalorder 1, %s14
      %p158 = scmp.lt.s32.totalorder %s14, 3
      %p159 = pnand %p157, %p158
      %p160 = pneg %p159
      // Predicated region
      $region25: #{tpu_custom_call.1} parent=5 // pred_check
        _
      $region26: #{tpu_custom_call.1} parent=5 // pred_check_branch
        %162 = sbr.rel (%p159) target = $region28
      $region27: #{tpu_custom_call.1} parent=5 // pred_region
        %s163 = ssub.s32 %s14, 1
        %s164 = sand.u32 %s27, 1
        %s165 = scalar_lea.sflag [#allocation3], %s164
        %s166 = sand.u32 %s27, 1
        %s167 = smul.addr %s166, 48
        %s168 = scalar_lea.vmem [#allocation2], %s167
        // Predicated region
        $region29: #{tpu_custom_call.1} parent=27 // pred_check
          %p169 = pneg %p40
        $region30: #{tpu_custom_call.1} parent=27 // pred_check_branch
          %171 = sbr.rel (%p169) target = $region32
        $region31: #{tpu_custom_call.1} parent=27 // pred_region
          %172 = dma.done %s165, 768
        $region32: #{tpu_custom_call.1} parent=27 // pred_fallthru
          _
        %s173 = sand.u32 %s27, 1
        %s174 = scalar_lea.sflag [#allocation3], %s173
        %s175 = sand.u32 %s27, 1
        %s176 = smul.addr %s175, 48
        %s177 = scalar_lea.vmem [#allocation2], %s176
        %p178 = pneg %p40
        %p179 = pneg %p37
        %s180 = smul.u32 3, %s19
        %s181 = ssub.s32 5, %s180
        %p182 = scmp.lt.s32.totalorder %s181, 3
        %s183 = scalar_select %p182, %s181, 3
        %s184 = smul.u32 128, %s183
        %p185 = scmp.lt.s32.totalorder %s180, 4
        %s186 = scalar_select %p185, %s180, 4
        %s187 = smul.addr %s186, 8
        %s188 = scalar_lea.vmem %s1, %s187
        %p189 = pneg %p66
        %p190 = pneg %p63
        %p191 = pneg %p92
        %p192 = pneg %p89
        %s193 = sand.u32 %s79, 1
        %s194 = scalar_lea.sflag [#allocation4], %s193
        %s195 = sand.u32 %s79, 1
        %s196 = smul.addr %s195, 48
        %s197 = scalar_lea.vmem [#allocation5], %s196
        %s198 = smul.u32 3, %s19
        %s199 = ssub.s32 5, %s198
        %p200 = scmp.lt.s32.totalorder %s199, 3
        %s201 = scalar_select %p200, %s199, 3
        %s202 = smul.u32 128, %s201
        %s203 = smul.u32 %s202, 2
        %s204 = smul.u32 3, %s19
        %s205 = ssub.s32 5, %s204
        %p206 = scmp.lt.s32.totalorder %s205, 3
        %s207 = scalar_select %p206, %s205, 3
        %s208 = smul.u32 128, %s207
        %p209 = scmp.lt.s32.totalorder %s204, 4
        %s210 = scalar_select %p209, %s204, 4
        %s211 = smul.addr %s210, 8
        %s212 = scalar_lea.vmem %s1, %s211
        %s213 = smul.u32 3, %s19
        %s214 = ssub.s32 5, %s213
        %p215 = scmp.lt.s32.totalorder %s214, 3
        %s216 = scalar_select %p215, %s214, 3
        %s217 = smul.u32 128, %s216
        %s218 = smul.u32 3, %s19
        %s219 = ssub.s32 5, %s218
        %p220 = scmp.lt.s32.totalorder %s219, 3
        %s221 = scalar_select %p220, %s219, 3
        %s222 = smul.u32 128, %s221
        %s223 = smul.u32 %s222, 2
        %v224 = vld [vmem:[%s212] sm:$0xff]
        %v225 = vld [vmem:[%s212 + $0x8] sm:$0xff]
        %v226 = vld [vmem:[%s212 + $0x10] sm:$0xff]
        %v227 = vld [vmem:[%s168] sm:$0xff]
        %v228 = vld [vmem:[%s168 + $0x8] sm:$0xff]
        %v229 = vld [vmem:[%s168 + $0x10] sm:$0xff]
        %v230 = vld [vmem:[%s168 + $0x18] sm:$0xff]
        %v231 = vld [vmem:[%s168 + $0x20] sm:$0xff]
        %v232 = vld [vmem:[%s168 + $0x28] sm:$0xff]
        %234 = vset.pattern.permute.xlu0 0
        %235 = vperm.xlu0 %234, %v224
        %v236 = vpop.permute.xlu0 %235
        %239 = vset.pattern.permute.xlu0 0
        %240 = vperm.xlu0 %239, %v225
        %v241 = vpop.permute.xlu0 %240
        %244 = vset.pattern.permute.xlu0 0
        %245 = vperm.xlu0 %244, %v226
        %v246 = vpop.permute.xlu0 %245
        %v248 = vmul.f32 %v227, %v236
        %v249 = vmul.f32 %v228, %v236
        %v250 = vmul.f32 %v229, %v241
        %v251 = vmul.f32 %v230, %v241
        %v252 = vmul.f32 %v231, %v246
        %v253 = vmul.f32 %v232, %v246
        %254 = vset.pattern.permute.xlu0 1
        %255 = vperm.xlu0 %254, %v224
        %v256 = vpop.permute.xlu0 %255
        %258 = vset.pattern.permute.xlu0 1
        %259 = vperm.xlu0 %258, %v225
        %v260 = vpop.permute.xlu0 %259
        %262 = vset.pattern.permute.xlu0 1
        %263 = vperm.xlu0 %262, %v226
        %v264 = vpop.permute.xlu0 %263
        %v266 = vsub.f32 %v248, %v256
        %v267 = vsub.f32 %v249, %v256
        %v268 = vsub.f32 %v250, %v260
        %v269 = vsub.f32 %v251, %v260
        %v270 = vsub.f32 %v252, %v264
        %v271 = vsub.f32 %v253, %v264
        %272 = vst [vmem:[%s197] sm:$0xff] %v266
        %273 = vst [vmem:[%s197 + $0x8] sm:$0xff] %v267
        %274 = vst [vmem:[%s197 + $0x10] sm:$0xff] %v268
        %275 = vst [vmem:[%s197 + $0x18] sm:$0xff] %v269
        %276 = vst [vmem:[%s197 + $0x20] sm:$0xff] %v270
        %277 = vst [vmem:[%s197 + $0x28] sm:$0xff] %v271
        %s278 = sand.u32 %s79, 1
        %s279 = scalar_lea.sflag [#allocation4], %s278
        %s280 = sand.u32 %s79, 1
        %s281 = smul.addr %s280, 48
        %s282 = scalar_lea.vmem [#allocation5], %s281
        // Predicated region
        $region33: #{tpu_custom_call.1} parent=27 // pred_check
          %p283 = pneg %p89
        $region34: #{tpu_custom_call.1} parent=27 // pred_check_branch
          %285 = sbr.rel (%p283) target = $region36
        $region35: #{tpu_custom_call.1} parent=27 // pred_region
          %s286 = smul.u32 3, %s19
          %s287 = ssub.s32 5, %s286
          %p288 = scmp.lt.s32.totalorder %s287, 3
          %s289 = scalar_select %p288, %s287, 3
          %s290 = smul.u32 128, %s289
          %s291 = smul.u32 %s290, 2
          %s293 = ssub.s32 768, %s291
          %294 = vsyncadd %s279, %s293
          %p295 = scmp.ne.s32.totalorder 0, %s291
          %s296 = smul.addr %s286, 2
          %s297 = smul.addr %s296, 128
          %s298 = scalar_lea.hbm %s2, %s297
          %s299 = smul.u32 16, %s289
          %s300 = sshll.u32 %s282, 4
          %s301 = int_to_ptr.vmem [resolvable:$true] %s300
          %s302 = sshll.u32 %s299, 4
          %306 = dma.vmem_to_hbm [thread:$0]  (%p295), %s301, %s302, %s298, %s279, 256, 256, 16
        $region36: #{tpu_custom_call.1} parent=27 // pred_fallthru
          _
      $region28: #{tpu_custom_call.1} parent=5 // pred_fallthru
        _
      %p307 = scmp.le.s32.totalorder 2, %s14
      // Predicated region
      $region37: #{tpu_custom_call.1} parent=5 // pred_check
        %p308 = pneg %p307
      $region38: #{tpu_custom_call.1} parent=5 // pred_check_branch
        %310 = sbr.rel (%p308) target = $region40
      $region39: #{tpu_custom_call.1} parent=5 // pred_region
        %s311 = ssub.s32 %s14, 2
        // Predicated region
        $region41: #{tpu_custom_call.1} parent=39 // pred_check
          %p312 = pneg %p95
        $region42: #{tpu_custom_call.1} parent=39 // pred_check_branch
          %314 = sbr.rel (%p312) target = $region44
        $region43: #{tpu_custom_call.1} parent=39 // pred_region
          %s315 = sand.u32 %s80, 1
          %s316 = scalar_lea.sflag [#allocation4], %s315
          %s317 = sand.u32 %s80, 1
          %s318 = smul.addr %s317, 48
          %s319 = scalar_lea.vmem [#allocation5], %s318
          %320 = dma.done %s316, 768
        $region44: #{tpu_custom_call.1} parent=39 // pred_fallthru
          _
      $region40: #{tpu_custom_call.1} parent=5 // pred_fallthru
        _
    $region6: #{tpu_custom_call.1} parent=1 // loop_footer
      %s18 = sadd.s32 1, %s14
    $region7: #{tpu_custom_call.1} parent=1 // loop_footer_branch
      %13 = sbr.rel target = $region3
    $region8: #{tpu_custom_call.1} parent=1 // loop_exit
      _
    %321 = vsyncpa [#allocation3], 1
    %s322 = scalar_lea.sflag [#allocation3], 1
    %323 = vsyncpa %s322, 1
    %324 = vsyncpa [#allocation4], 1
    %s325 = scalar_lea.sflag [#allocation4], 1
    %326 = vsyncpa %s325, 1

</llo_original>
